<compile_context>
chip_gen: v7x
topology: tpu7x:2x2x1
jax: 0.10.0
libtpu: 0.0.40
codegen_flags: <defaults>
</compile_context>

<pallas_src>
import functools

import jax
import jax.numpy as jnp
from jax.experimental import pallas as pl
from jax.experimental.pallas import tpu as pltpu
import numpy as np


def _round_up(a, m):
    return ((a + m - 1) // m) * m


def _fused_conv_kernel(taps_ref, bias_ref, x_ref, o_ref, *, num_taps):
    """Single fused pass over a fixed-width slab.

    taps_ref : SMEM (num_taps,) f32 -- effective taps of the stacked convs
    bias_ref : SMEM (1,)        f32 -- effective bias
    x_ref    : VMEM (block_n, l_pad)      (lane axis = sequence)
    o_ref    : VMEM (block_n, l_out_pad)
    """
    x = x_ref[...].astype(jnp.float32)
    l_pad = x.shape[-1]
    l_out_pad = o_ref.shape[-1]
    lane_axis = x.ndim - 1  # Mosaic roll requires a non-negative axis index.

    # acc[:, t] = sum_k taps[k] * x[:, t + k]; valid for t < l_out, the padded
    # tail is garbage and gets cropped in the wrapper.
    acc = taps_ref[0] * x
    for k in range(1, num_taps):
        # Lane rotate on the XLU keeps a fixed layout (no narrowing slices).
        # roll by (l_pad - k) <=> shifted[:, t] = x[:, (t + k) % l_pad].
        shifted = pltpu.roll(x, shift=(l_pad - k) % l_pad, axis=lane_axis)
        acc = acc + taps_ref[k] * shifted
    acc = acc + bias_ref[0]

    # Prefix slice is lane-aligned (l_out_pad is a multiple of 128 or == l_pad).
    o_ref[...] = acc[:, :l_out_pad].astype(o_ref.dtype)


def _fuse_layers(weights, biases):
    """Fold the stacked Conv1d(1,1,k) layers into one (taps, bias).

    Composing cross-correlations:  c = w_1 * w_2 * ... (ordinary convolution of
    the tap vectors);  b_eff folds each bias through the later layers' tap sums.
    """
    w = jnp.asarray(weights, jnp.float32)
    b = jnp.asarray(biases, jnp.float32)
    taps = jnp.ones((1,), jnp.float32)
    bias = jnp.zeros((), jnp.float32)
    for i in range(w.shape[0]):
        taps = jnp.convolve(taps, w[i], mode="full")
        bias = bias * jnp.sum(w[i]) + b[i]
    return taps, jnp.reshape(bias, (1,))


def _choose_block_rows(n, l_pad, target_bytes=2 * 1024 * 1024):
    """Pick a batch-block size: ~2 MiB per input buffer, multiple of 8 rows."""
    rows = max(8, target_bytes // (l_pad * 4))
    rows = min(rows, 2048)
    rows = (rows // 8) * 8
    if rows >= n:
        return n  # full batch in one block (block dim == full array dim is ok)
    return rows


def causal_conv1d(x, weights, biases, *, kernel_size, block_rows=None):
    """x: (N, 1, L) float.  weights: (num_layers, kernel_size). biases: (num_layers,)."""
    n, c, length = x.shape
    assert c == 1, "Casual_Conv1D uses single-channel Conv1d layers"
    num_layers = weights.shape[0]
    shrink = num_layers * (kernel_size - 1)
    l_out = length - shrink
    assert l_out > 0, "input too short for receptive field"
    num_taps = shrink + 1

    taps, bias = _fuse_layers(weights, biases)

    # Lane-dense layout: pad L (and the padded output width) to multiples of 128.
    l_pad = _round_up(length, 128)
    l_out_pad = min(_round_up(l_out, 128), l_pad)

    x2d = x.reshape(n, length).astype(jnp.float32)
    if l_pad != length:
        x2d = jnp.pad(x2d, ((0, 0), (0, l_pad - length)))

    if block_rows is None:
        block_n = _choose_block_rows(n, l_pad)
    else:
        block_n = n if block_rows >= n else max(8, (block_rows // 8) * 8)
    grid = (pl.cdiv(n, block_n),)

    kernel = functools.partial(_fused_conv_kernel, num_taps=num_taps)

    out2d = pl.pallas_call(
        kernel,
        out_shape=jax.ShapeDtypeStruct((n, l_out_pad), jnp.float32),
        grid=grid,
        in_specs=[
            pl.BlockSpec(memory_space=pltpu.MemorySpace.SMEM),   # fused taps
            pl.BlockSpec(memory_space=pltpu.MemorySpace.SMEM),   # fused bias
            pl.BlockSpec((block_n, l_pad), lambda i: (i, 0)),    # input slab
        ],
        out_specs=pl.BlockSpec((block_n, l_out_pad), lambda i: (i, 0)),
        compiler_params=pltpu.CompilerParams(
            dimension_semantics=("parallel",),
            vmem_limit_bytes=32 * 1024 * 1024,
        ),
    )(taps, bias, x2d)

    return out2d[:, :l_out].reshape(n, 1, l_out)


def _reference(x, weights, biases, kernel_size):
    """Pure-numpy, layer-by-layer reference of the stacked Conv1d forward."""
    x = np.asarray(x, dtype=np.float64)
    w = np.asarray(weights, dtype=np.float64)
    b = np.asarray(biases, dtype=np.float64)
    y = x
    for i in range(w.shape[0]):
        l_cur = y.shape[-1]
        l_out = l_cur - (kernel_size - 1)
        acc = np.zeros(y.shape[:-1] + (l_out,), dtype=np.float64)
        for k in range(kernel_size):
            acc += w[i, k] * y[..., k:k + l_out]
        y = acc + b[i]
    return y


if __name__ == "__main__":
    # Module hyper-parameters: receptive_field=4, kernel_size=2
    #   -> 3 stacked Conv1d(1, 1, 2) layers, each shrinking L by 1.
    receptive_field = 4
    kernel_size = 2
    num_layers = receptive_field - 1

    key = jax.random.PRNGKey(0)
    kx1, kx2, kw, kb = jax.random.split(key, 4)

    # nn.Conv1d(1, 1, k) params: weight (1,1,k), bias (1,) per layer -> stacked.
    weights = jax.random.normal(kw, (num_layers, kernel_size), dtype=jnp.float32) * 0.5
    biases = jax.random.normal(kb, (num_layers,), dtype=jnp.float32) * 0.1

    # Case 1: small canonical shape (batch=2, C=1, L=16).
    x1 = jax.random.normal(kx1, (2, 1, 16), dtype=jnp.float32)
    out1 = jax.block_until_ready(
        causal_conv1d(x1, weights, biases, kernel_size=kernel_size))
    expected_shape = (2, 1, 16 - num_layers * (kernel_size - 1))
    assert out1.shape == expected_shape, (out1.shape, expected_shape)
    np.testing.assert_allclose(
        np.asarray(out1, dtype=np.float64),
        _reference(x1, weights, biases, kernel_size), rtol=1e-4, atol=1e-5)

    # Case 2: exercises batch-grid pipelining (partial last block) + L padding.
    x2 = jax.random.normal(kx2, (20, 1, 300), dtype=jnp.float32)
    out2 = jax.block_until_ready(
        causal_conv1d(x2, weights, biases, kernel_size=kernel_size, block_rows=8))
    np.testing.assert_allclose(
        np.asarray(out2, dtype=np.float64),
        _reference(x2, weights, biases, kernel_size), rtol=1e-4, atol=1e-5)

    print("KERNEL_OK")
</pallas_src>

<mosaic_0001>
module attributes {stable_mosaic.version = 11 : i64} {
  func.func @_fused_conv_kernel(%arg0: i32, %arg1: memref<4xf32, #tpu.memory_space<smem>>, %arg2: memref<1xf32, #tpu.memory_space<smem>>, %arg3: memref<2x128xf32, #tpu.memory_space<vmem>>, %arg4: memref<2x128xf32, #tpu.memory_space<vmem>>) attributes {dimension_semantics = [#tpu.dimension_semantics<parallel>], iteration_bounds = array<i64: 1>, scalar_prefetch = 0 : i64, scratch_operands = 0 : i64, tpu.core_type = #tpu.core_type<tc>, window_params = [{transform_indices = @transform_0, window_bounds = array<i64: 4>}, {transform_indices = @transform_1, window_bounds = array<i64: 1>}, {transform_indices = @transform_2, window_bounds = array<i64: 2, 128>}, {transform_indices = @transform_3, window_bounds = array<i64: 2, 128>}]} {
    %c0 = arith.constant 0 : index
    %c0_0 = arith.constant 0 : index
    %0 = vector.load %arg3[%c0, %c0_0] : memref<2x128xf32, #tpu.memory_space<vmem>>, vector<2x128xf32>
    %c0_1 = arith.constant 0 : index
    %1 = memref.load %arg1[%c0_1] : memref<4xf32, #tpu.memory_space<smem>>
    %2 = vector.broadcast %1 : f32 to vector<2x128xf32>
    %3 = arith.mulf %2, %0 : vector<2x128xf32>
    %c127_i32 = arith.constant 127 : i32
    %4 = tpu.dynamic_rotate %0 by %c127_i32 dim 1 : vector<2x128xf32>, i32 -> vector<2x128xf32>
    %c1 = arith.constant 1 : index
    %5 = memref.load %arg1[%c1] : memref<4xf32, #tpu.memory_space<smem>>
    %6 = vector.broadcast %5 : f32 to vector<2x128xf32>
    %7 = arith.mulf %6, %4 : vector<2x128xf32>
    %8 = arith.addf %3, %7 : vector<2x128xf32>
    %c126_i32 = arith.constant 126 : i32
    %9 = tpu.dynamic_rotate %0 by %c126_i32 dim 1 : vector<2x128xf32>, i32 -> vector<2x128xf32>
    %c2 = arith.constant 2 : index
    %10 = memref.load %arg1[%c2] : memref<4xf32, #tpu.memory_space<smem>>
    %11 = vector.broadcast %10 : f32 to vector<2x128xf32>
    %12 = arith.mulf %11, %9 : vector<2x128xf32>
    %13 = arith.addf %8, %12 : vector<2x128xf32>
    %c125_i32 = arith.constant 125 : i32
    %14 = tpu.dynamic_rotate %0 by %c125_i32 dim 1 : vector<2x128xf32>, i32 -> vector<2x128xf32>
    %c3 = arith.constant 3 : index
    %15 = memref.load %arg1[%c3] : memref<4xf32, #tpu.memory_space<smem>>
    %16 = vector.broadcast %15 : f32 to vector<2x128xf32>
    %17 = arith.mulf %16, %14 : vector<2x128xf32>
    %18 = arith.addf %13, %17 : vector<2x128xf32>
    %c0_2 = arith.constant 0 : index
    %19 = memref.load %arg2[%c0_2] : memref<1xf32, #tpu.memory_space<smem>>
    %20 = vector.broadcast %19 : f32 to vector<2x128xf32>
    %21 = arith.addf %18, %20 : vector<2x128xf32>
    %c0_3 = arith.constant 0 : index
    %c0_4 = arith.constant 0 : index
    %22 = vector.load %arg4[%c0_3, %c0_4] : memref<2x128xf32, #tpu.memory_space<vmem>>, vector<2x128xf32>
    tpu.vector_store %arg4[%c0_3, %c0_4], %21 {strides = array<i32>} : memref<2x128xf32, #tpu.memory_space<vmem>>, vector<2x128xf32>,
    return
  }
  func.func @transform_0(%arg0: i32) -> i32 {
    %c0_i32 = arith.constant 0 : i32
    %c0_i32_0 = arith.constant 0 : i32
    return %c0_i32 : i32
  }
  func.func @transform_1(%arg0: i32) -> i32 {
    %c0_i32 = arith.constant 0 : i32
    %c0_i32_0 = arith.constant 0 : i32
    return %c0_i32 : i32
  }
  func.func @transform_2(%arg0: i32) -> (i32, i32) {
    %c0_i32 = arith.constant 0 : i32
    %c0_i32_0 = arith.constant 0 : i32
    return %arg0, %c0_i32 : i32, i32
  }
  func.func @transform_3(%arg0: i32) -> (i32, i32) {
    %c0_i32 = arith.constant 0 : i32
    %c0_i32_0 = arith.constant 0 : i32
    return %arg0, %c0_i32 : i32, i32
  }
}

</mosaic_0001>

<llo_original>
// kernel: tpu_custom_call.1
$region0: #{tpu_custom_call.1}
  #allocation0 [shape = 'u32[]', space=smem, size = 0x4, offset = 0x4, fixed_abs, tag = 'smem constant byte address 0x4 - core index']
  #allocation1 [shape = 'u32[144,128]{1,0:T(1,128)}', space=vmem, size = 0x12000, scoped, tag = 'internal scratch']
  #allocation2 [shape = 'f32[1]{0:T(128)S(6)}', space=smem, size = 0x200, scoped, tag = 'scoped memory for tpu_custom_call.1']
  %s0 = inlined_call_operand.vmem [shape: f32[4], index: 0, kind: input, shape index: {}]
  %s1 = inlined_call_operand.<no memory space> [shape: f32[1], index: 1, kind: input, shape index: {}]
  %s2 = inlined_call_operand.vmem [shape: f32[2,128], index: 2, kind: input, shape index: {}]
  %s3 = inlined_call_operand.hbm [shape: f32[2,128], index: 3, kind: output, shape index: {}]
  %s4 = sld [smem:[#allocation0]]
  $region26: #{tpu_custom_call.1} parent=0
    _
  %s6 = ssub.s32 1, %s4
  %s7 = scalar_select 0, %s6, %s4
  %8 = sst [smem:[#allocation2]] %s1
  $region1: #{tpu_custom_call.1} parent=0
    #allocation3 [shape = 'u8[512]{0}', space=smem, size = 0x200, scoped, tag = 'input window, operand 0, single buffered']
    #allocation4 [shape = 's32[1]{0}', space=sflag, size = 0x4, scoped, tag = 'scoped memory for tpu_custom_call.1']
    #allocation5 [shape = 's32[1]{0}', space=sflag, size = 0x4, scoped, tag = 'scoped memory for tpu_custom_call.1']
    #allocation6 [shape = 'u8[1024]{0}', space=vmem, size = 0x400, scoped, tag = 'output window, operand 0, single buffered']
    %9 = vsyncpa [#allocation5], 0
    %10 = vsyncpa [#allocation4], 0
    // Predicated region
    $region2: #{tpu_custom_call.1} parent=1 // pred_check
      _
    $region3: #{tpu_custom_call.1} parent=1 // pred_check_branch
      %12 = sbr.rel (0) target = $region5
    $region4: #{tpu_custom_call.1} parent=1 // pred_region
      %s14 = ssub.s32 16, 16
      %15 = vsyncadd [#allocation5], %s14
      %s17 = sshll.u32 %s0, 4
      %s18 = int_to_ptr.vmem [resolvable:$true] %s17
      %20 = dma.vmem_to_smem %s18, 16, [#allocation3], [#allocation5]
    $region5: #{tpu_custom_call.1} parent=1 // pred_fallthru
      _
    // Predicated region
    $region6: #{tpu_custom_call.1} parent=1 // pred_check
      _
    $region7: #{tpu_custom_call.1} parent=1 // pred_check_branch
      %22 = sbr.rel (0) target = $region9
    $region8: #{tpu_custom_call.1} parent=1 // pred_region
      _
    $region9: #{tpu_custom_call.1} parent=1 // pred_fallthru
      _
    // Predicated region
    $region10: #{tpu_custom_call.1} parent=1 // pred_check
      _
    $region11: #{tpu_custom_call.1} parent=1 // pred_check_branch
      %24 = sbr.rel (0) target = $region13
    $region12: #{tpu_custom_call.1} parent=1 // pred_region
      _
    $region13: #{tpu_custom_call.1} parent=1 // pred_fallthru
      _
    // Predicated region
    $region14: #{tpu_custom_call.1} parent=1 // pred_check
      _
    $region15: #{tpu_custom_call.1} parent=1 // pred_check_branch
      %26 = sbr.rel (0) target = $region17
    $region16: #{tpu_custom_call.1} parent=1 // pred_region
      %27 = dma.done [#allocation5], 16
    $region17: #{tpu_custom_call.1} parent=1 // pred_fallthru
      _
    %28 = sfence
    %v29 = vld [vmem:[%s2] sm:$0x3]
    %s30 = sld [smem:[#allocation3]]
    %v31 = vstv %s30
    %v32 = vmul.f32 %v31, %v29
    %33 = vrot.lane.b32.xlu0 %v29, 127
    %v34 = vpop.permute.xlu0 %33
    %s35 = sld [smem:[#allocation3 + $0x1]]
    %v36 = vstv %s35
    %v37 = vmul.f32 %v36, %v34
    %v38 = vadd.f32 %v32, %v37
    %39 = vrot.lane.b32.xlu0 %v29, 126
    %v40 = vpop.permute.xlu0 %39
    %s41 = sld [smem:[#allocation3 + $0x2]]
    %v42 = vstv %s41
    %v43 = vmul.f32 %v42, %v40
    %v44 = vadd.f32 %v38, %v43
    %45 = vrot.lane.b32.xlu0 %v29, 125
    %v46 = vpop.permute.xlu0 %45
    %s47 = sld [smem:[#allocation3 + $0x3]]
    %v48 = vstv %s47
    %v49 = vmul.f32 %v48, %v46
    %v50 = vadd.f32 %v44, %v49
    %s51 = sld [smem:[#allocation2]]
    %v52 = vstv %s51
    %v53 = vadd.f32 %v50, %v52
    %54 = vst [vmem:[#allocation6] sm:$0x3] %v53
    // Predicated region
    $region18: #{tpu_custom_call.1} parent=1 // pred_check
      _
    $region19: #{tpu_custom_call.1} parent=1 // pred_check_branch
      %56 = sbr.rel (0) target = $region21
    $region20: #{tpu_custom_call.1} parent=1 // pred_region
      %s58 = ssub.s32 32, 32
      %59 = vsyncadd [#allocation4], %s58
      %s61 = sshll.u32 [#allocation6], 4
      %s62 = int_to_ptr.vmem [resolvable:$true] %s61
      %64 = dma.vmem_to_hbm [thread:$0]  %s62, 32, %s3, [#allocation4]
    $region21: #{tpu_custom_call.1} parent=1 // pred_fallthru
      _
    // Predicated region
    $region22: #{tpu_custom_call.1} parent=1 // pred_check
      _
    $region23: #{tpu_custom_call.1} parent=1 // pred_check_branch
      %66 = sbr.rel (0) target = $region25
    $region24: #{tpu_custom_call.1} parent=1 // pred_region
      %67 = dma.done [#allocation4], 32
    $region25: #{tpu_custom_call.1} parent=1 // pred_fallthru
      _
    %68 = vsyncpa [#allocation4], 1
    %69 = vsyncpa [#allocation5], 1

</llo_original>
